<compile_context>
chip_gen: v6e
topology: v6e:2x2x1
jax: 0.10.0
libtpu: 0.0.40
codegen_flags: <defaults>
</compile_context>

<pallas_src>
import jax
import jax.numpy as jnp
import numpy as np
from jax.experimental import pallas as pl
from jax.experimental.pallas import tpu as pltpu


# --------------------------------------------------------------------------
# Kernels
# --------------------------------------------------------------------------
def _fused_affine_kernel(x_ref, w_ref, b_ref, o_ref):
    # Single MXU pass: y = x @ W + b  (all three layers folded host-side).
    y = jnp.dot(x_ref[...], w_ref[...], preferred_element_type=jnp.float32)
    o_ref[...] = (y + b_ref[...]).astype(o_ref.dtype)


def _two_stage_affine_kernel(x_ref, w1_ref, w2_ref, b_ref, o_ref, h_acc):
    # Genuinely-low-rank path: y = (x @ W1) @ W2 + b, with the first matmul
    # K-tiled along in_dim (innermost "arbitrary" grid axis) and accumulated
    # in an f32 VMEM scratch.  W1 = Wa^T Wt^T, W2 = Wb^T, b = bt @ Wb^T.
    @pl.when(pl.program_id(1) == 0)
    def _():
        h_acc[...] = jnp.zeros_like(h_acc)

    h_acc[...] += jnp.dot(x_ref[...], w1_ref[...],
                          preferred_element_type=jnp.float32)

    @pl.when(pl.program_id(1) == pl.num_programs(1) - 1)
    def _():
        y = jnp.dot(h_acc[...], w2_ref[...], preferred_element_type=jnp.float32)
        o_ref[...] = (y + b_ref[...]).astype(o_ref.dtype)


# --------------------------------------------------------------------------
# Host-side sizing helpers
# --------------------------------------------------------------------------
def _round_up(v: int, m: int) -> int:
    return -(-v // m) * m


def _vmem_limit_bytes() -> int:
    """Scoped-VMEM limit to request: ~3/4 of physical VMEM, capped at 96 MiB.
    Physical VMEM: v5e/v6e 128 MiB, v7x 64 MiB.  The default scoped limits
    (16 / 32 MiB) are too small for the HBM-roofline row tiles we want, so we
    always set vmem_limit_bytes explicitly."""
    phys = 64 << 20                     # assume the tightest chip (v7x) if query fails
    try:
        info = pltpu.get_tpu_info()
        cap = int(getattr(info, "vmem_capacity_bytes", 0) or 0)
        if cap > 0:
            phys = cap
    except Exception:
        pass
    return min((phys * 3) // 4, 96 << 20)


def _pick_tile_rows(rows: int, bytes_per_row: int, resident_bytes: int,
                    vmem_limit: int, sublane: int) -> int:
    """Row-tile from a VMEM budget.

    `bytes_per_row` is the (lane-padded) x + y bytes of one row; Pallas
    double-buffers those blocks.  `resident_bytes` covers the grid-invariant
    weight/bias blocks (double-buffered by Pallas as well).  The tile is
    capped at 1024 rows (>= ~85% of the HBM roofline per measured tile data)
    and so the parallel grid keeps >= 4 steps whenever there is enough work
    (2 steps per TensorCore on v7x megacore keeps the DMA pipeline busy)."""
    headroom = 2 << 20
    avail = vmem_limit - resident_bytes - headroom
    if avail <= 0 or bytes_per_row <= 0:
        tile = sublane
    else:
        tile = max(avail // (2 * bytes_per_row), sublane)
    tile = min(tile, 1024)
    if rows >= 4 * sublane:
        tile = min(tile, _round_up(-(-rows // 4), sublane))
    tile = max((tile // sublane) * sublane, sublane)
    return int(min(tile, rows))


# --------------------------------------------------------------------------
# Forward pass
# --------------------------------------------------------------------------
def low_rank_data_init_block(x, a_weight, t_weight, t_bias, b_weight, *,
                             small_bypass_bytes=1 << 20):
    """Forward pass of LowRankDataInitBlock.

    x:        [N, in_dim]
    a_weight: [rank, in_dim]   (low_rank_init_left == A.weight; A.bias == 0)
    t_weight: [rank, rank]     (T.weight)
    t_bias:   [rank]           (T.bias)
    b_weight: [out_dim, rank]  (low_rank_init_right == B.weight; B.bias == 0)
    """
    n, in_dim = x.shape
    rank = a_weight.shape[0]
    out_dim = b_weight.shape[0]
    out_dtype = x.dtype
    f32 = jnp.float32

    # ---- host-side affine folding (exact: no nonlinearity, A/B bias == 0).
    # Fold in f32 so low-precision weights don't round differently from the
    # original three-layer chain.
    w1 = a_weight.astype(f32).T @ t_weight.astype(f32).T        # [in_dim, rank]
    w2 = b_weight.astype(f32).T                                 # [rank, out_dim]
    bias = t_bias.astype(f32)[None, :] @ w2                     # [1, out_dim]

    itemsize = jnp.dtype(out_dtype).itemsize

    # ---- small-problem bypass: below ~1 MiB of x+y traffic the Pallas
    # launch / per-step overhead dominates; let XLA fuse the folded matmul.
    if n * (in_dim + out_dim) * itemsize < small_bypass_bytes:
        y = x.astype(f32) @ (w1 @ w2) + bias
        return y.astype(out_dtype)

    # ---- lane-dense packing factor for narrow outputs: pack `pack`
    # consecutive rows into one (close-to-)128-lane output row by multiplying
    # a [rows, pack*in_dim] view of x with a block-diagonal folded weight.
    pack = max(1, 128 // out_dim) if out_dim < 128 else 1
    while pack > 1 and pack * in_dim > 4096:     # keep packed K width sane
        pack //= 2

    # Fold all three layers into one matmul unless the (block-diagonal) fold
    # inflates MACs too much vs. the genuinely-low-rank two-stage form.  The
    # kernel is HBM-bound, so tolerate a generous 16x MAC inflation.
    full_fold = pack * in_dim * out_dim <= 16 * (in_dim * rank + rank * out_dim)

    sublane = {1: 32, 2: 16}.get(itemsize, 8)    # dtype-aware sublane multiple
    vmem_limit = _vmem_limit_bytes()

    # ======================================================================
    # Path 1: fully folded single matmul (optionally row-packed).
    # ======================================================================
    if full_fold:
        w_full = w1 @ w2                                         # [in_dim, out_dim]
        if pack > 1:
            w_full = jnp.kron(jnp.eye(pack, dtype=f32), w_full)  # block-diagonal
            bias_k = jnp.tile(bias, (1, pack))
        else:
            bias_k = bias
        kin, kout = pack * in_dim, pack * out_dim

        # Pad N so x reshapes into whole, sublane-aligned packed rows; the
        # padded rows are sliced off the output.
        n_pad = _round_up(n, pack * sublane)
        xq = jnp.pad(x, ((0, n_pad - n), (0, 0))) if n_pad != n else x
        rows = n_pad // pack
        xq = xq.reshape(rows, kin)

        # VMEM accounting (lane/sublane padded, weights double-buffered).
        kin_l, kout_l = _round_up(kin, 128), _round_up(kout, 128)
        resident = 2 * 4 * (_round_up(kin, 8) * kout_l + 8 * kout_l)
        bytes_per_row = (kin_l + kout_l) * itemsize
        tile = _pick_tile_rows(rows, bytes_per_row, resident, vmem_limit, sublane)
        grid = (-(-rows // tile),)

        out = pl.pallas_call(
            _fused_affine_kernel,
            out_shape=jax.ShapeDtypeStruct((rows, kout), out_dtype),
            grid_spec=pltpu.PrefetchScalarGridSpec(
                num_scalar_prefetch=0,
                grid=grid,
                in_specs=[
                    pl.BlockSpec((tile, kin), lambda i: (i, 0)),
                    pl.BlockSpec((kin, kout), lambda i: (0, 0)),   # VMEM-resident weight
                    pl.BlockSpec((1, kout), lambda i: (0, 0)),
                ],
                out_specs=pl.BlockSpec((tile, kout), lambda i: (i, 0)),
            ),
            compiler_params=pltpu.CompilerParams(
                dimension_semantics=("parallel",),
                vmem_limit_bytes=vmem_limit),
        )(xq, w_full, bias_k)

        out = out.reshape(rows * pack, out_dim)
        return out[:n] if n_pad != n else out

    # ======================================================================
    # Path 2: genuinely low-rank -> two-stage matmul, K-tiled over in_dim.
    # (Triggers only when in_dim/out_dim are huge relative to rank; reads of
    # x dominate traffic there, so the narrow output store is not the
    # bottleneck and no row packing is applied.)
    # ======================================================================
    n_pad = _round_up(n, sublane)
    xq = jnp.pad(x, ((0, n_pad - n), (0, 0))) if n_pad != n else x
    rows = n_pad

    if in_dim > 1024:
        tk = 512                                    # multiple of 128
        k_pad = _round_up(in_dim, tk)
        if k_pad != in_dim:                         # zero K padding: exact
            xq = jnp.pad(xq, ((0, 0), (0, k_pad - in_dim)))
            w1 = jnp.pad(w1, ((0, k_pad - in_dim), (0, 0)))
    else:
        tk = in_dim
        k_pad = in_dim
    k_steps = k_pad // tk

    tk_l = _round_up(tk, 128)
    rank_l = _round_up(rank, 128)
    out_l = _round_up(out_dim, 128)
    # w1 block + w2 + bias (double-buffered, f32), plus per-row x/y blocks and
    # the f32 hidden accumulator scratch.
    resident = 2 * 4 * (tk * rank_l + _round_up(rank, 8) * out_l + 8 * out_l)
    bytes_per_row = (tk_l + out_l) * itemsize + rank_l * 4
    tile = _pick_tile_rows(rows, bytes_per_row, resident, vmem_limit, sublane)
    grid = (-(-rows // tile), k_steps)

    out = pl.pallas_call(
        _two_stage_affine_kernel,
        out_shape=jax.ShapeDtypeStruct((rows, out_dim), out_dtype),
        grid_spec=pltpu.PrefetchScalarGridSpec(
            num_scalar_prefetch=0,
            grid=grid,
            in_specs=[
                pl.BlockSpec((tile, tk), lambda i, k: (i, k)),
                pl.BlockSpec((tk, rank), lambda i, k: (k, 0)),
                pl.BlockSpec((rank, out_dim), lambda i, k: (0, 0)),
                pl.BlockSpec((1, out_dim), lambda i, k: (0, 0)),
            ],
            out_specs=pl.BlockSpec((tile, out_dim), lambda i, k: (i, 0)),
            scratch_shapes=[pltpu.VMEM((tile, rank), jnp.float32)],
        ),
        compiler_params=pltpu.CompilerParams(
            dimension_semantics=("parallel", "arbitrary"),
            vmem_limit_bytes=vmem_limit),
    )(xq, w1, w2, bias)

    return out[:n] if n_pad != n else out


# --------------------------------------------------------------------------
# Demo / self-test
# --------------------------------------------------------------------------
if __name__ == "__main__":
    def make_inputs(key, n, in_dim, rank, out_dim):
        k_x, k_a, k_b, k_tw, k_tb = jax.random.split(key, 5)
        x = jax.random.normal(k_x, (n, in_dim), dtype=jnp.float32)
        # low_rank_init_left has the shape of A.weight: (rank, in_dim)
        a_w = jax.random.normal(k_a, (rank, in_dim), dtype=jnp.float32) * 0.1
        # low_rank_init_right has the shape of B.weight: (out_dim, rank)
        b_w = jax.random.normal(k_b, (out_dim, rank), dtype=jnp.float32) * 0.1
        # T is a plain nn.Linear(rank, rank): uniform(+-1/sqrt(rank)) init.
        bound = 1.0 / np.sqrt(rank)
        t_w = jax.random.uniform(k_tw, (rank, rank), minval=-bound,
                                 maxval=bound, dtype=jnp.float32)
        t_b = jax.random.uniform(k_tb, (rank,), minval=-bound, maxval=bound,
                                 dtype=jnp.float32)
        return x, a_w, t_w, t_b, b_w

    def reference(x, a_w, t_w, t_b, b_w):
        xr = np.asarray(x, np.float64)
        Wa = np.asarray(a_w, np.float64)
        Wt = np.asarray(t_w, np.float64)
        bt = np.asarray(t_b, np.float64)
        Wb = np.asarray(b_w, np.float64)
        return ((xr @ Wa.T) @ Wt.T + bt) @ Wb.T    # A/B biases are zero

    key = jax.random.PRNGKey(0)
    k1, k2 = jax.random.split(key)

    # 1) Packed single-matmul path (narrow out_dim -> 128-lane packed output).
    args1 = make_inputs(k1, 2048, 32, 8, 16)
    out1 = jax.block_until_ready(
        low_rank_data_init_block(*args1, small_bypass_bytes=0))
    np.testing.assert_allclose(np.asarray(out1, np.float64), reference(*args1),
                               rtol=1e-4, atol=1e-4)

    # 2) Genuinely-low-rank two-stage path with a K-tiled first matmul.
    args2 = make_inputs(k2, 512, 2048, 8, 256)
    out2 = jax.block_until_ready(
        low_rank_data_init_block(*args2, small_bypass_bytes=0))
    np.testing.assert_allclose(np.asarray(out2, np.float64), reference(*args2),
                               rtol=1e-4, atol=1e-4)

    # 3) Small-problem XLA bypass (default threshold).
    out3 = jax.block_until_ready(low_rank_data_init_block(*args1))
    np.testing.assert_allclose(np.asarray(out3, np.float64), reference(*args1),
                               rtol=1e-4, atol=1e-4)

    print("KERNEL_OK")
</pallas_src>

<mosaic_0001>
module attributes {stable_mosaic.version = 11 : i64} {
  func.func @_fused_affine_kernel(%arg0: i32, %arg1: memref<64x256xf32, #tpu.memory_space<vmem>>, %arg2: memref<256x128xf32, #tpu.memory_space<vmem>>, %arg3: memref<1x128xf32, #tpu.memory_space<vmem>>, %arg4: memref<64x128xf32, #tpu.memory_space<vmem>>) attributes {dimension_semantics = [#tpu.dimension_semantics<parallel>], iteration_bounds = array<i64: 4>, scalar_prefetch = 0 : i64, scratch_operands = 0 : i64, tpu.core_type = #tpu.core_type<tc>, window_params = [{transform_indices = @transform_0, window_bounds = array<i64: 64, 256>}, {pipeline_mode = #tpu.pipeline_mode<synchronous>, transform_indices = @transform_1, window_bounds = array<i64: 256, 128>}, {pipeline_mode = #tpu.pipeline_mode<synchronous>, transform_indices = @transform_2, window_bounds = array<i64: 1, 128>}, {transform_indices = @transform_3, window_bounds = array<i64: 64, 128>}]} {
    %c0 = arith.constant 0 : index
    %c0_0 = arith.constant 0 : index
    %0 = vector.load %arg1[%c0, %c0_0] : memref<64x256xf32, #tpu.memory_space<vmem>>, vector<64x256xf32>
    %c0_1 = arith.constant 0 : index
    %c0_2 = arith.constant 0 : index
    %1 = vector.load %arg2[%c0_1, %c0_2] : memref<256x128xf32, #tpu.memory_space<vmem>>, vector<256x128xf32>
    %cst = arith.constant dense<0.000000e+00> : vector<64x128xf32>
    %2 = tpu.matmul %0, %1, %cst {dimension_numbers = #tpu.dot_dimension_numbers<[1], [0], [0], [1], [0, 0, 1, 1], [], []>} : vector<64x256xf32>, vector<256x128xf32>, vector<64x128xf32> -> vector<64x128xf32>
    %c0_3 = arith.constant 0 : index
    %c0_4 = arith.constant 0 : index
    %3 = vector.load %arg3[%c0_3, %c0_4] : memref<1x128xf32, #tpu.memory_space<vmem>>, vector<1x128xf32>
    %4 = vector.broadcast %3 : vector<1x128xf32> to vector<64x128xf32>
    %5 = arith.addf %2, %4 : vector<64x128xf32>
    %c0_5 = arith.constant 0 : index
    %c0_6 = arith.constant 0 : index
    %6 = vector.load %arg4[%c0_5, %c0_6] : memref<64x128xf32, #tpu.memory_space<vmem>>, vector<64x128xf32>
    tpu.vector_store %arg4[%c0_5, %c0_6], %5 {strides = array<i32>} : memref<64x128xf32, #tpu.memory_space<vmem>>, vector<64x128xf32>,
    return
  }
  func.func @transform_0(%arg0: i32) -> (i32, i32) {
    %c0_i32 = arith.constant 0 : i32
    %c0_i32_0 = arith.constant 0 : i32
    return %arg0, %c0_i32 : i32, i32
  }
  func.func @transform_1(%arg0: i32) -> (i32, i32) {
    %c0_i32 = arith.constant 0 : i32
    %c0_i32_0 = arith.constant 0 : i32
    %c0_i32_1 = arith.constant 0 : i32
    return %c0_i32, %c0_i32_0 : i32, i32
  }
  func.func @transform_2(%arg0: i32) -> (i32, i32) {
    %c0_i32 = arith.constant 0 : i32
    %c0_i32_0 = arith.constant 0 : i32
    %c0_i32_1 = arith.constant 0 : i32
    return %c0_i32, %c0_i32_0 : i32, i32
  }
  func.func @transform_3(%arg0: i32) -> (i32, i32) {
    %c0_i32 = arith.constant 0 : i32
    %c0_i32_0 = arith.constant 0 : i32
    return %arg0, %c0_i32 : i32, i32
  }
}

</mosaic_0001>

<llo_original>
// kernel: tpu_custom_call.1
$region0: #{tpu_custom_call.1}
  #allocation0 [shape = 'u32[]', space=smem, size = 0x4, offset = 0x4, fixed_abs, tag = 'smem constant byte address 0x4 - core index']
  #allocation1 [shape = 'u32[144,128]{1,0:T(1,128)}', space=vmem, size = 0x12000, scoped, tag = 'internal scratch']
  %s0 = inlined_call_operand.hbm [shape: f32[256,256], index: 0, kind: input, shape index: {}]
  %s1 = inlined_call_operand.hbm [shape: f32[256,128], index: 1, kind: input, shape index: {}]
  %s2 = inlined_call_operand.vmem [shape: f32[1,128], index: 2, kind: input, shape index: {}]
  %s3 = inlined_call_operand.hbm [shape: f32[256,128], index: 3, kind: output, shape index: {}]
  %s4 = sld [smem:[#allocation0]]
  $region53: #{tpu_custom_call.1} parent=0
    _
  %s6 = ssub.s32 1, %s4
  %s7 = scalar_select 0, %s6, %s4
  $region1: #{tpu_custom_call.1} parent=0
    #allocation2 [shape = 'u8[131072]{0}', space=vmem, size = 0x20000, scoped, tag = 'input window, operand 0']
    #allocation3 [shape = 's32[2]{0}', space=sflag, size = 0x8, scoped, tag = 'scoped memory for tpu_custom_call.1']
    #allocation4 [shape = 's32[2]{0}', space=sflag, size = 0x8, scoped, tag = 'scoped memory for tpu_custom_call.1']
    #allocation5 [shape = 'u8[131072]{0}', space=vmem, size = 0x20000, scoped, tag = 'input window, operand 1, single buffered']
    #allocation6 [shape = 's32[1]{0}', space=sflag, size = 0x4, scoped, tag = 'scoped memory for tpu_custom_call.1']
    #allocation7 [shape = 'u8[65536]{0}', space=vmem, size = 0x10000, scoped, tag = 'output window, operand 0']
    %8 = vsyncpa [#allocation3], 0
    %s9 = scalar_lea.sflag [#allocation3], 1
    %10 = vsyncpa %s9, 0
    %11 = vsyncpa [#allocation6], 0
    %12 = vsyncpa [#allocation4], 0
    %s13 = scalar_lea.sflag [#allocation4], 1
    %14 = vsyncpa %s13, 0
    loop: start=0, step=1, limit=6
    $region2: #{tpu_custom_call.1} parent=1 // loop_pre_header
      _
    $region3: #{tpu_custom_call.1} parent=1 // loop_header
      %s16 = sphi 0, %s20
      %p17 = scmp.ge.s32.totalorder %s16, 6
      %s26 = sphi 0, %s28
      %s29 = sphi 0, %s26
      %s30 = sphi 0, %s29
      %s46 = sphi 0, %s30
      %s50 = sphi 0, %s50
      %s52 = sphi 0, %s50
      %s53 = sphi 0, %s52
      %s67 = sphi 0, %s53
      %s71 = sphi 0, %s71
      %s73 = sphi 0, %s71
      %s74 = sphi 0, %s73
      %s88 = sphi 0, %s74
      %s94 = sphi 0, %s96
      %s97 = sphi 0, %s94
      %s98 = sphi 0, %s97
      %s114 = sphi 0, %s98
    $region4: #{tpu_custom_call.1} parent=1 // loop_header_branch
      %19 = sbr.rel (%p17) target = $region8
    $region5: #{tpu_custom_call.1} parent=1 // loop_body
      %s21 = ssub.s32 %s16, 1
      %s22 = ssub.s32 %s16, 2
      %s23 = sadd.s32 %s16, 1
      %s24 = ssub.s32 %s16, %s23
      %p25 = scmp.eq.s32.totalorder %s24, 0
      %s27 = sadd.s32 %s26, 1
      %s28 = scalar_select %p25, %s26, %s27
      %p31 = pneg %p25
      %p32 = scmp.eq.s32.totalorder %s16, 3
      %p33 = por %p31, %p32
      %p34 = scmp.ne.s32.totalorder %s26, %s29
      %p35 = scmp.eq.s32.totalorder %s16, 0
      %p36 = por %p34, %p35
      %p37 = scmp.ne.s32.totalorder %s26, %s29
      %p38 = scmp.eq.s32.totalorder %s21, 3
      %p39 = por %p37, %p38
      %p40 = scmp.ne.s32.totalorder %s29, %s30
      %p41 = scmp.eq.s32.totalorder %s21, 0
      %p42 = por %p40, %p41
      %p43 = scmp.ne.s32.totalorder %s29, %s30
      %p44 = scmp.eq.s32.totalorder %s22, 3
      %p45 = por %p43, %p44
      %p47 = scmp.ne.s32.totalorder %s30, %s46
      %p48 = scmp.eq.s32.totalorder %s22, 0
      %p49 = por %p47, %p48
      %s51 = sadd.s32 %s50, 1
      %p54 = scmp.eq.s32.totalorder %s16, 3
      %p55 = scmp.ne.s32.totalorder %s50, %s52
      %p56 = scmp.eq.s32.totalorder %s16, 0
      %p57 = por %p55, %p56
      %p58 = scmp.ne.s32.totalorder %s50, %s52
      %p59 = scmp.eq.s32.totalorder %s21, 3
      %p60 = por %p58, %p59
      %p61 = scmp.ne.s32.totalorder %s52, %s53
      %p62 = scmp.eq.s32.totalorder %s21, 0
      %p63 = por %p61, %p62
      %p64 = scmp.ne.s32.totalorder %s52, %s53
      %p65 = scmp.eq.s32.totalorder %s22, 3
      %p66 = por %p64, %p65
      %p68 = scmp.ne.s32.totalorder %s53, %s67
      %p69 = scmp.eq.s32.totalorder %s22, 0
      %p70 = por %p68, %p69
      %s72 = sadd.s32 %s71, 1
      %p75 = scmp.eq.s32.totalorder %s16, 3
      %p76 = scmp.ne.s32.totalorder %s71, %s73
      %p77 = scmp.eq.s32.totalorder %s16, 0
      %p78 = por %p76, %p77
      %p79 = scmp.ne.s32.totalorder %s71, %s73
      %p80 = scmp.eq.s32.totalorder %s21, 3
      %p81 = por %p79, %p80
      %p82 = scmp.ne.s32.totalorder %s73, %s74
      %p83 = scmp.eq.s32.totalorder %s21, 0
      %p84 = por %p82, %p83
      %p85 = scmp.ne.s32.totalorder %s73, %s74
      %p86 = scmp.eq.s32.totalorder %s22, 3
      %p87 = por %p85, %p86
      %p89 = scmp.ne.s32.totalorder %s74, %s88
      %p90 = scmp.eq.s32.totalorder %s22, 0
      %p91 = por %p89, %p90
      %s92 = ssub.s32 %s16, %s23
      %p93 = scmp.eq.s32.totalorder %s92, 0
      %s95 = sadd.s32 %s94, 1
      %s96 = scalar_select %p93, %s94, %s95
      %p99 = pneg %p93
      %p100 = scmp.eq.s32.totalorder %s16, 3
      %p101 = por %p99, %p100
      %p102 = scmp.ne.s32.totalorder %s94, %s97
      %p103 = scmp.eq.s32.totalorder %s16, 0
      %p104 = por %p102, %p103
      %p105 = scmp.ne.s32.totalorder %s94, %s97
      %p106 = scmp.eq.s32.totalorder %s21, 3
      %p107 = por %p105, %p106
      %p108 = scmp.ne.s32.totalorder %s97, %s98
      %p109 = scmp.eq.s32.totalorder %s21, 0
      %p110 = por %p108, %p109
      %p111 = scmp.ne.s32.totalorder %s97, %s98
      %p112 = scmp.eq.s32.totalorder %s22, 3
      %p113 = por %p111, %p112
      %p115 = scmp.ne.s32.totalorder %s98, %s114
      %p116 = scmp.eq.s32.totalorder %s22, 0
      %p117 = por %p115, %p116
      %p118 = scmp.le.s32.totalorder 1, %s16
      %p119 = scmp.lt.s32.totalorder %s16, 5
      %p120 = pnand %p118, %p119
      %p121 = pneg %p120
      // Predicated region
      $region9: #{tpu_custom_call.1} parent=5 // pred_check
        _
      $region10: #{tpu_custom_call.1} parent=5 // pred_check_branch
        %123 = sbr.rel (%p120) target = $region12
      $region11: #{tpu_custom_call.1} parent=5 // pred_region
        %s124 = ssub.s32 %s16, 1
        // Predicated region
        $region13: #{tpu_custom_call.1} parent=11 // pred_check
          %p125 = pneg %p63
        $region14: #{tpu_custom_call.1} parent=11 // pred_check_branch
          %127 = sbr.rel (%p125) target = $region16
        $region15: #{tpu_custom_call.1} parent=11 // pred_region
          %s129 = ssub.s32 4096, 4096
          %130 = vsyncadd [#allocation6], %s129
          %s131 = sshll.u32 [#allocation5], 4
          %s132 = int_to_ptr.vmem [resolvable:$true] %s131
          %137 = dma.hbm_to_vmem [thread:$0]  %s1, 4096, %s132, [#allocation6], 128, 128, 8
        $region16: #{tpu_custom_call.1} parent=11 // pred_fallthru
          _
        // Predicated region
        $region17: #{tpu_custom_call.1} parent=11 // pred_check
          %p138 = pneg %p84
        $region18: #{tpu_custom_call.1} parent=11 // pred_check_branch
          %140 = sbr.rel (%p138) target = $region20
        $region19: #{tpu_custom_call.1} parent=11 // pred_region
          _
        $region20: #{tpu_custom_call.1} parent=11 // pred_fallthru
          _
      $region12: #{tpu_custom_call.1} parent=5 // pred_fallthru
        _
      %p141 = scmp.lt.s32.totalorder %s16, 4
      // Predicated region
      $region21: #{tpu_custom_call.1} parent=5 // pred_check
        %p142 = pneg %p141
      $region22: #{tpu_custom_call.1} parent=5 // pred_check_branch
        %144 = sbr.rel (%p142) target = $region24
      $region23: #{tpu_custom_call.1} parent=5 // pred_region
        // Predicated region
        $region25: #{tpu_custom_call.1} parent=23 // pred_check
          %p145 = pneg %p36
        $region26: #{tpu_custom_call.1} parent=23 // pred_check_branch
          %147 = sbr.rel (%p145) target = $region28
        $region27: #{tpu_custom_call.1} parent=23 // pred_region
          %s148 = sand.u32 %s26, 1
          %s149 = scalar_lea.sflag [#allocation3], %s148
          %s150 = sand.u32 %s26, 1
          %s151 = smul.addr %s150, 128
          %s152 = scalar_lea.vmem [#allocation2], %s151
          %s153 = smul.u32 8, %s16
          %s155 = ssub.s32 2048, 2048
          %156 = vsyncadd %s149, %s155
          %s157 = smul.addr %s153, 2
          %s158 = smul.addr %s157, 128
          %s159 = scalar_lea.hbm %s0, %s158
          %s160 = sshll.u32 %s152, 4
          %s161 = int_to_ptr.vmem [resolvable:$true] %s160
          %166 = dma.hbm_to_vmem [thread:$0]  %s159, 2048, %s161, %s149, 256, 256, 16
        $region28: #{tpu_custom_call.1} parent=23 // pred_fallthru
          _
      $region24: #{tpu_custom_call.1} parent=5 // pred_fallthru
        _
      %p167 = scmp.le.s32.totalorder 1, %s16
      %p168 = scmp.lt.s32.totalorder %s16, 5
      %p169 = pnand %p167, %p168
      %p170 = pneg %p169
      // Predicated region
      $region29: #{tpu_custom_call.1} parent=5 // pred_check
        _
      $region30: #{tpu_custom_call.1} parent=5 // pred_check_branch
        %172 = sbr.rel (%p169) target = $region32
      $region31: #{tpu_custom_call.1} parent=5 // pred_region
        %s173 = ssub.s32 %s16, 1
        %s174 = sand.u32 %s29, 1
        %s175 = scalar_lea.sflag [#allocation3], %s174
        %s176 = sand.u32 %s29, 1
        %s177 = smul.addr %s176, 128
        %s178 = scalar_lea.vmem [#allocation2], %s177
        // Predicated region
        $region33: #{tpu_custom_call.1} parent=31 // pred_check
          %p179 = pneg %p42
        $region34: #{tpu_custom_call.1} parent=31 // pred_check_branch
          %181 = sbr.rel (%p179) target = $region36
        $region35: #{tpu_custom_call.1} parent=31 // pred_region
          %182 = dma.done %s175, 2048
        $region36: #{tpu_custom_call.1} parent=31 // pred_fallthru
          _
        // Predicated region
        $region37: #{tpu_custom_call.1} parent=31 // pred_check
          %p183 = pneg %p63
        $region38: #{tpu_custom_call.1} parent=31 // pred_check_branch
          %185 = sbr.rel (%p183) target = $region40
        $region39: #{tpu_custom_call.1} parent=31 // pred_region
          %186 = dma.done [#allocation6], 4096
        $region40: #{tpu_custom_call.1} parent=31 // pred_fallthru
          _
        %s187 = sand.u32 %s29, 1
        %s188 = scalar_lea.sflag [#allocation3], %s187
        %s189 = sand.u32 %s29, 1
        %s190 = smul.addr %s189, 128
        %s191 = scalar_lea.vmem [#allocation2], %s190
        %p192 = pneg %p42
        %p193 = pneg %p39
        %p194 = pneg %p63
        %p195 = pneg %p60
        %p196 = pneg %p84
        %p197 = pneg %p81
        %p198 = pneg %p110
        %p199 = pneg %p107
        %s200 = sand.u32 %s97, 1
        %s201 = scalar_lea.sflag [#allocation4], %s200
        %s202 = sand.u32 %s97, 1
        %s203 = smul.addr %s202, 64
        %s204 = scalar_lea.vmem [#allocation7], %s203
        %s205 = smul.u32 8, %s21
        %s206 = smul.u32 8, %s21
        %v207 = vld [vmem:[%s178] sm:$0xff]
        %v208 = vld [vmem:[%s178 + $0x8] sm:$0xff]
        %v209 = vld [vmem:[%s178 + $0x10] sm:$0xff]
        %v210 = vld [vmem:[%s178 + $0x18] sm:$0xff]
        %v211 = vld [vmem:[%s178 + $0x20] sm:$0xff]
        %v212 = vld [vmem:[%s178 + $0x28] sm:$0xff]
        %v213 = vld [vmem:[%s178 + $0x30] sm:$0xff]
        %v214 = vld [vmem:[%s178 + $0x38] sm:$0xff]
        %v215 = vld [vmem:[%s178 + $0x40] sm:$0xff]
        %v216 = vld [vmem:[%s178 + $0x48] sm:$0xff]
        %v217 = vld [vmem:[%s178 + $0x50] sm:$0xff]
        %v218 = vld [vmem:[%s178 + $0x58] sm:$0xff]
        %v219 = vld [vmem:[%s178 + $0x60] sm:$0xff]
        %v220 = vld [vmem:[%s178 + $0x68] sm:$0xff]
        %v221 = vld [vmem:[%s178 + $0x70] sm:$0xff]
        %v222 = vld [vmem:[%s178 + $0x78] sm:$0xff]
        %v223 = vld [vmem:[#allocation5] sm:$0xff]
        %v224 = vld [vmem:[#allocation5 + $0x8] sm:$0xff]
        %v225 = vld [vmem:[#allocation5 + $0x10] sm:$0xff]
        %v226 = vld [vmem:[#allocation5 + $0x18] sm:$0xff]
        %v227 = vld [vmem:[#allocation5 + $0x20] sm:$0xff]
        %v228 = vld [vmem:[#allocation5 + $0x28] sm:$0xff]
        %v229 = vld [vmem:[#allocation5 + $0x30] sm:$0xff]
        %v230 = vld [vmem:[#allocation5 + $0x38] sm:$0xff]
        %v231 = vld [vmem:[#allocation5 + $0x40] sm:$0xff]
        %v232 = vld [vmem:[#allocation5 + $0x48] sm:$0xff]
        %v233 = vld [vmem:[#allocation5 + $0x50] sm:$0xff]
        %v234 = vld [vmem:[#allocation5 + $0x58] sm:$0xff]
        %v235 = vld [vmem:[#allocation5 + $0x60] sm:$0xff]
        %v236 = vld [vmem:[#allocation5 + $0x68] sm:$0xff]
        %v237 = vld [vmem:[#allocation5 + $0x70] sm:$0xff]
        %v238 = vld [vmem:[#allocation5 + $0x78] sm:$0xff]
        %v239 = vld [vmem:[#allocation5 + $0x80] sm:$0xff]
        %v240 = vld [vmem:[#allocation5 + $0x88] sm:$0xff]
        %v241 = vld [vmem:[#allocation5 + $0x90] sm:$0xff]
        %v242 = vld [vmem:[#allocation5 + $0x98] sm:$0xff]
        %v243 = vld [vmem:[#allocation5 + $0xa0] sm:$0xff]
        %v244 = vld [vmem:[#allocation5 + $0xa8] sm:$0xff]
        %v245 = vld [vmem:[#allocation5 + $0xb0] sm:$0xff]
        %v246 = vld [vmem:[#allocation5 + $0xb8] sm:$0xff]
        %v247 = vld [vmem:[#allocation5 + $0xc0] sm:$0xff]
        %v248 = vld [vmem:[#allocation5 + $0xc8] sm:$0xff]
        %v249 = vld [vmem:[#allocation5 + $0xd0] sm:$0xff]
        %v250 = vld [vmem:[#allocation5 + $0xd8] sm:$0xff]
        %v251 = vld [vmem:[#allocation5 + $0xe0] sm:$0xff]
        %v252 = vld [vmem:[#allocation5 + $0xe8] sm:$0xff]
        %v253 = vld [vmem:[#allocation5 + $0xf0] sm:$0xff]
        %v254 = vld [vmem:[#allocation5 + $0xf8] sm:$0xff]
        %v255 = vld [vmem:[%s2] sm:$0x1]
        %v257 = vlaneseq
        %v258 = vshrl.u32 %v257, 7
        %v259 = vsub.s32 0, %v258
        %v260 = vrot.slane %v255, %v259
        %262 = vmatprep.subr.mxu0 0.0
        %263 = vmatpush1.msra.mxu0 %v238
        %264 = vmatprep.subr.mxu0 0.0
        %265 = vmatpush1.msra.mxu0 %v237
        %266 = vmatprep.subr.mxu0 0.0
        %267 = vmatpush1.msra.mxu0 %v236
        %268 = vmatprep.subr.mxu0 0.0
        %269 = vmatpush1.msra.mxu0 %v235
        %270 = vmatprep.subr.mxu0 0.0
        %271 = vmatpush1.msra.mxu0 %v234
        %272 = vmatprep.subr.mxu0 0.0
        %273 = vmatpush1.msra.mxu0 %v233
        %274 = vmatprep.subr.mxu0 0.0
        %275 = vmatpush1.msra.mxu0 %v232
        %276 = vmatprep.subr.mxu0 0.0
        %277 = vmatpush1.msra.mxu0 %v231
        %278 = vmatprep.subr.mxu0 0.0
        %279 = vmatpush1.msra.mxu0 %v230
        %280 = vmatprep.subr.mxu0 0.0
        %281 = vmatpush1.msra.mxu0 %v229
        %282 = vmatprep.subr.mxu0 0.0
        %283 = vmatpush1.msra.mxu0 %v228
        %284 = vmatprep.subr.mxu0 0.0
        %285 = vmatpush1.msra.mxu0 %v227
        %286 = vmatprep.subr.mxu0 0.0
        %287 = vmatpush1.msra.mxu0 %v226
        %288 = vmatprep.subr.mxu0 0.0
        %289 = vmatpush1.msra.mxu0 %v225
        %290 = vmatprep.subr.mxu0 0.0
        %291 = vmatpush1.msra.mxu0 %v224
        %292 = vmatprep.subr.mxu0 0.0
        %293 = vmatpush1.msra.mxu0 %v223
        %294 = vmatprep.subr.mxu0 0.0
        %295 = vmatpush2.msra.mxu0 %v254
        %296 = vmatprep.subr.mxu0 0.0
        %297 = vmatpush2.msra.mxu0 %v253
        %298 = vmatprep.subr.mxu0 0.0
        %299 = vmatpush2.msra.mxu0 %v252
        %300 = vmatprep.subr.mxu0 0.0
        %301 = vmatpush2.msra.mxu0 %v251
        %302 = vmatprep.subr.mxu0 0.0
        %303 = vmatpush2.msra.mxu0 %v250
        %304 = vmatprep.subr.mxu0 0.0
        %305 = vmatpush2.msra.mxu0 %v249
        %306 = vmatprep.subr.mxu0 0.0
        %307 = vmatpush2.msra.mxu0 %v248
        %308 = vmatprep.subr.mxu0 0.0
        %309 = vmatpush2.msra.mxu0 %v247
        %310 = vmatprep.subr.mxu0 0.0
        %311 = vmatpush2.msra.mxu0 %v246
        %312 = vmatprep.subr.mxu0 0.0
        %313 = vmatpush2.msra.mxu0 %v245
        %314 = vmatprep.subr.mxu0 0.0
        %315 = vmatpush2.msra.mxu0 %v244
        %316 = vmatprep.subr.mxu0 0.0
        %317 = vmatpush2.msra.mxu0 %v243
        %318 = vmatprep.subr.mxu0 0.0
        %319 = vmatpush2.msra.mxu0 %v242
        %320 = vmatprep.subr.mxu0 0.0
        %321 = vmatpush2.msra.mxu0 %v241
        %322 = vmatprep.subr.mxu0 0.0
        %323 = vmatpush2.msra.mxu0 %v240
        %324 = vmatprep.subr.mxu0 0.0
        %325 = vmatpush2.msra.mxu0 %v239
        %326 = vmatprep.mubr.f32.mxu0 %v208
        %327 = vmatmul.mubr.f32.gmra.mxu0 %v207
        %v328 = vpop.f32.mrf.mxu0
        %v329 = vadd.f32 %v260, %v328
        %v330 = vpop.f32.mrf.mxu0
        %331 = vmatprep.mubr.f32.mxu0 %v210
        %332 = vmatmul.mubr.f32.gmra.mxu0 %v209
        %v333 = vpop.f32.mrf.mxu0
        %v334 = vadd.f32 %v260, %v333
        %v335 = vpop.f32.mrf.mxu0
        %336 = vmatprep.mubr.f32.mxu0 %v212
        %337 = vmatmul.mubr.f32.gmra.mxu0 %v211
        %v338 = vpop.f32.mrf.mxu0
        %v339 = vadd.f32 %v260, %v338
        %v340 = vpop.f32.mrf.mxu0
        %341 = vmatprep.mubr.f32.mxu0 %v214
        %342 = vmatmul.mubr.f32.gmra.mxu0 %v213
        %v343 = vpop.f32.mrf.mxu0
        %v344 = vadd.f32 %v260, %v343
        %v345 = vpop.f32.mrf.mxu0
        %346 = vmatprep.mubr.f32.mxu0 %v216
        %347 = vmatmul.mubr.f32.gmra.mxu0 %v215
        %v348 = vpop.f32.mrf.mxu0
        %v349 = vadd.f32 %v260, %v348
        %v350 = vpop.f32.mrf.mxu0
        %351 = vmatprep.mubr.f32.mxu0 %v218
        %352 = vmatmul.mubr.f32.gmra.mxu0 %v217
        %v353 = vpop.f32.mrf.mxu0
        %v354 = vadd.f32 %v260, %v353
        %v355 = vpop.f32.mrf.mxu0
        %356 = vmatprep.mubr.f32.mxu0 %v220
        %357 = vmatmul.mubr.f32.gmra.mxu0 %v219
        %v358 = vpop.f32.mrf.mxu0
        %v359 = vadd.f32 %v260, %v358
        %v360 = vpop.f32.mrf.mxu0
        %361 = vmatprep.mubr.f32.mxu0 %v222
        %362 = vmatmul.mubr.f32.gmra.mxu0 %v221
        %v363 = vpop.f32.mrf.mxu0
        %v364 = vadd.f32 %v260, %v363
        %v365 = vpop.f32.mrf.mxu0
        %366 = vdwg.mxu0
        %367 = vst [vmem:[%s204] sm:$0xff] %v329
        %368 = vst [vmem:[%s204 + $0x8] sm:$0xff] %v334
        %369 = vst [vmem:[%s204 + $0x10] sm:$0xff] %v339
        %370 = vst [vmem:[%s204 + $0x18] sm:$0xff] %v344
        %371 = vst [vmem:[%s204 + $0x20] sm:$0xff] %v349
        %372 = vst [vmem:[%s204 + $0x28] sm:$0xff] %v354
        %373 = vst [vmem:[%s204 + $0x30] sm:$0xff] %v359
        %374 = vst [vmem:[%s204 + $0x38] sm:$0xff] %v364
        %s375 = sand.u32 %s97, 1
        %s376 = scalar_lea.sflag [#allocation4], %s375
        %s377 = sand.u32 %s97, 1
        %s378 = smul.addr %s377, 64
        %s379 = scalar_lea.vmem [#allocation7], %s378
        // Predicated region
        $region41: #{tpu_custom_call.1} parent=31 // pred_check
          %p380 = pneg %p107
        $region42: #{tpu_custom_call.1} parent=31 // pred_check_branch
          %382 = sbr.rel (%p380) target = $region44
        $region43: #{tpu_custom_call.1} parent=31 // pred_region
          %s383 = smul.u32 8, %s21
          %s385 = ssub.s32 1024, 1024
          %386 = vsyncadd %s376, %s385
          %s387 = smul.addr %s383, 128
          %s388 = scalar_lea.hbm %s3, %s387
          %s389 = sshll.u32 %s379, 4
          %s390 = int_to_ptr.vmem [resolvable:$true] %s389
          %395 = dma.vmem_to_hbm [thread:$0]  %s390, 1024, %s388, %s376, 128, 128, 8
        $region44: #{tpu_custom_call.1} parent=31 // pred_fallthru
          _
      $region32: #{tpu_custom_call.1} parent=5 // pred_fallthru
        _
      %p396 = scmp.le.s32.totalorder 2, %s16
      // Predicated region
      $region45: #{tpu_custom_call.1} parent=5 // pred_check
        %p397 = pneg %p396
      $region46: #{tpu_custom_call.1} parent=5 // pred_check_branch
        %399 = sbr.rel (%p397) target = $region48
      $region47: #{tpu_custom_call.1} parent=5 // pred_region
        %s400 = ssub.s32 %s16, 2
        // Predicated region
        $region49: #{tpu_custom_call.1} parent=47 // pred_check
          %p401 = pneg %p113
        $region50: #{tpu_custom_call.1} parent=47 // pred_check_branch
          %403 = sbr.rel (%p401) target = $region52
        $region51: #{tpu_custom_call.1} parent=47 // pred_region
          %s404 = sand.u32 %s98, 1
          %s405 = scalar_lea.sflag [#allocation4], %s404
          %s406 = sand.u32 %s98, 1
          %s407 = smul.addr %s406, 64
          %s408 = scalar_lea.vmem [#allocation7], %s407
          %409 = dma.done %s405, 1024
        $region52: #{tpu_custom_call.1} parent=47 // pred_fallthru
          _
      $region48: #{tpu_custom_call.1} parent=5 // pred_fallthru
        _
    $region6: #{tpu_custom_call.1} parent=1 // loop_footer
      %s20 = sadd.s32 1, %s16
    $region7: #{tpu_custom_call.1} parent=1 // loop_footer_branch
      %15 = sbr.rel target = $region3
    $region8: #{tpu_custom_call.1} parent=1 // loop_exit
      _
    %410 = vsyncpa [#allocation3], 1
    %s411 = scalar_lea.sflag [#allocation3], 1
    %412 = vsyncpa %s411, 1
    %413 = vsyncpa [#allocation6], 1
    %414 = vsyncpa [#allocation4], 1
    %s415 = scalar_lea.sflag [#allocation4], 1
    %416 = vsyncpa %s415, 1

</llo_original>
